<compile_context>
chip_gen: v5e
topology: v5e:2x2
jax: 0.10.0
libtpu: 0.0.40
codegen_flags: <defaults>
</compile_context>

<pallas_src>
import math

import jax
import jax.numpy as jnp
from jax.experimental import pallas as pl
from jax.experimental.pallas import tpu as pltpu

LANE = 128
SUBLANE = 8


def _round_up(n, m):
    return (n + m - 1) // m * m


def _pad2d(a, rows, cols):
    r, c = a.shape
    return jnp.pad(a, ((0, rows - r), (0, cols - c)))


def vae_kernel(x_ref, eps_ref,
               w1_ref, b1_ref, wh_ref, bh_ref,
               w3_ref, b3_ref, w4_ref, b4_ref,
               recon_ref, heads_ref):
    l_p = eps_ref.shape[1]            # padded latent width (multiple of 128)

    x = x_ref[...].astype(jnp.bfloat16)      # (tb, d_in), unpadded feature dim

    # encode: h1 = relu(x @ W1 + b1)   -- bf16 MXU matmul, f32 accumulation
    h1 = jnp.dot(x, w1_ref[...], preferred_element_type=jnp.float32) + b1_ref[...]
    h1 = jnp.maximum(h1, 0.0)

    # fused mu/logvar heads: one (H_p, 2*L_p) matmul, lane-aligned split
    heads = jnp.dot(h1.astype(jnp.bfloat16), wh_ref[...],
                    preferred_element_type=jnp.float32) + bh_ref[...]
    mu = heads[:, :l_p]
    logvar = heads[:, l_p:]

    # reparametrize (f32): z = eps * exp(0.5 * logvar) + mu
    std = jnp.exp(0.5 * logvar)
    z = eps_ref[...].astype(jnp.float32) * std + mu

    # decode: sigmoid(relu(z @ W3 + b3) @ W4 + b4)
    h3 = jnp.dot(z.astype(jnp.bfloat16), w3_ref[...],
                 preferred_element_type=jnp.float32) + b3_ref[...]
    h3 = jnp.maximum(h3, 0.0)
    logits = jnp.dot(h3.astype(jnp.bfloat16), w4_ref[...],
                     preferred_element_type=jnp.float32) + b4_ref[...]

    recon_ref[...] = jax.nn.sigmoid(logits).astype(recon_ref.dtype)  # bf16 store
    heads_ref[...] = heads                                           # f32 (mu | logvar)


def pack_params(params):
    """One-time weight packing: pad feature dims to lane multiples (W1 rows stay
    unpadded), fuse mu/logvar heads, cast weights to bf16. Call once & reuse."""
    d_in, hidden = params["w1"].shape
    latent = params["w21"].shape[1]
    h_p = _round_up(hidden, LANE)
    l_p = _round_up(latent, LANE)
    d_in_p = _round_up(d_in, LANE)

    w1 = _pad2d(params["w1"], d_in, h_p).astype(jnp.bfloat16)   # rows unpadded
    b1 = _pad2d(params["b1"], 1, h_p)

    wh = jnp.concatenate(
        [_pad2d(params["w21"], h_p, l_p), _pad2d(params["w22"], h_p, l_p)],
        axis=1).astype(jnp.bfloat16)
    bh = jnp.concatenate(
        [_pad2d(params["b21"], 1, l_p), _pad2d(params["b22"], 1, l_p)], axis=1)

    w3 = _pad2d(params["w3"], l_p, h_p).astype(jnp.bfloat16)
    b3 = _pad2d(params["b3"], 1, h_p)
    w4 = _pad2d(params["w4"], h_p, d_in_p).astype(jnp.bfloat16)
    b4 = _pad2d(params["b4"], 1, d_in_p)

    return (w1, b1, wh, bh, w3, b3, w4, b4)


def vae_forward(x, eps, weights, batch_tile=1024):
    """x: (B, in_features), eps: (B, latent); weights: output of pack_params."""
    w1, b1, wh, bh, w3, b3, w4, b4 = weights
    d_in = x.shape[1]
    latent = eps.shape[1]
    l_p = wh.shape[1] // 2
    d_in_p = w4.shape[1]

    B = x.shape[0]
    b8 = _round_up(B, SUBLANE)
    tb = min(batch_tile, b8)                  # batch tile (multiple of 8)
    if tb == b8 and b8 >= 2 * SUBLANE:
        # guarantee >= 2 grid steps so v7x can shard the batch over its 2 TCs
        tb = _round_up(b8 // 2, SUBLANE)
    b_pad = _round_up(B, tb)

    x_p = x if b_pad == B else jnp.pad(x, ((0, b_pad - B), (0, 0)))
    eps_p = _pad2d(eps, b_pad, l_p).astype(jnp.bfloat16)   # padded latent cols stay 0

    grid = (b_pad // tb,)
    tile_map = lambda i: (i, 0)      # activation tiles march over the batch
    resident = lambda i: (0, 0)      # weights stay VMEM-resident across grid steps

    weight_specs = [pl.BlockSpec(w.shape, resident)
                    for w in (w1, b1, wh, bh, w3, b3, w4, b4)]

    recon_p, heads_p = pl.pallas_call(
        vae_kernel,
        out_shape=(
            jax.ShapeDtypeStruct((b_pad, d_in_p), jnp.bfloat16),   # recon (bf16 halves HBM writes)
            jax.ShapeDtypeStruct((b_pad, 2 * l_p), jnp.float32),   # fused (mu | logvar)
        ),
        grid=grid,
        in_specs=[
            pl.BlockSpec((tb, d_in), tile_map),   # x: full (unpadded) feature dim
            pl.BlockSpec((tb, l_p), tile_map),    # eps (bf16)
            *weight_specs,
        ],
        out_specs=(
            pl.BlockSpec((tb, d_in_p), tile_map),
            pl.BlockSpec((tb, 2 * l_p), tile_map),
        ),
        compiler_params=pltpu.CompilerParams(
            dimension_semantics=("parallel",),
            vmem_limit_bytes=32 << 20,
        ),
    )(x_p, eps_p, w1, b1, wh, bh, w3, b3, w4, b4)

    recon = recon_p[:B, :d_in]
    mu = heads_p[:B, :latent]
    logvar = heads_p[:B, l_p:l_p + latent]
    return recon, mu, logvar


def init_params(key, in_features, hidden=500, latent=100):
    """Deterministic init matching nn.Linear's U(-1/sqrt(fan_in), 1/sqrt(fan_in))."""
    def linear(key, fan_in, fan_out):
        kw, kb = jax.random.split(key)
        bound = 1.0 / math.sqrt(fan_in)
        w = jax.random.uniform(kw, (fan_in, fan_out), jnp.float32, -bound, bound)
        b = jax.random.uniform(kb, (1, fan_out), jnp.float32, -bound, bound)
        return w, b

    k1, k21, k22, k3, k4 = jax.random.split(key, 5)
    w1, b1 = linear(k1, in_features, hidden)
    w21, b21 = linear(k21, hidden, latent)
    w22, b22 = linear(k22, hidden, latent)
    w3, b3 = linear(k3, latent, hidden)
    w4, b4 = linear(k4, hidden, in_features)
    return dict(w1=w1, b1=b1, w21=w21, b21=b21, w22=w22, b22=b22,
                w3=w3, b3=b3, w4=w4, b4=b4)


def vae_forward_ref(x, eps, p):
    """Pure-JAX f32 reference (original module semantics)."""
    h1 = jnp.maximum(x @ p["w1"] + p["b1"], 0.0)
    mu = h1 @ p["w21"] + p["b21"]
    logvar = h1 @ p["w22"] + p["b22"]
    z = eps * jnp.exp(0.5 * logvar) + mu
    h3 = jnp.maximum(z @ p["w3"] + p["b3"], 0.0)
    recon = jax.nn.sigmoid(h3 @ p["w4"] + p["b4"])
    return recon, mu, logvar


if __name__ == "__main__":
    key = jax.random.PRNGKey(0)
    k_x, k_eps, k_params = jax.random.split(key, 3)

    batch = 8
    in_features = 32   # small synthetic value for args.in_features
    hidden = 500
    latent = 100

    x = jax.random.normal(k_x, (batch, in_features), jnp.float32)
    # eps plays the role of torch.FloatTensor(std.size()).normal_(); bf16 noise
    # (precision of the noise is irrelevant, halves its HBM stream).
    eps = jax.random.normal(k_eps, (batch, latent), jnp.bfloat16)
    params = init_params(k_params, in_features, hidden, latent)

    weights = pack_params(params)   # pack once, outside the per-call path
    vae_fwd = jax.jit(vae_forward, static_argnames=("batch_tile",))

    recon, mu, logvar = vae_fwd(x, eps, weights)
    jax.block_until_ready((recon, mu, logvar))

    # sanity check against pure-JAX f32 reference (kernel matmuls are bf16 and
    # recon is stored bf16, so tolerance is relaxed accordingly)
    r_ref, mu_ref, lv_ref = vae_forward_ref(x, eps.astype(jnp.float32), params)
    assert recon.shape == r_ref.shape and mu.shape == mu_ref.shape
    assert logvar.shape == lv_ref.shape
    assert jnp.allclose(recon.astype(jnp.float32), r_ref, atol=5e-2, rtol=5e-2)
    assert jnp.allclose(mu, mu_ref, atol=5e-2, rtol=5e-2)
    assert jnp.allclose(logvar, lv_ref, atol=5e-2, rtol=5e-2)

    print("KERNEL_OK")
</pallas_src>

<mosaic_0001>
module attributes {stable_mosaic.version = 11 : i64} {
  func.func @vae_kernel(%arg0: i32, %arg1: memref<8x32xf32, #tpu.memory_space<vmem>>, %arg2: memref<8x128xbf16, #tpu.memory_space<vmem>>, %arg3: memref<32x512xbf16, #tpu.memory_space<vmem>>, %arg4: memref<1x512xf32, #tpu.memory_space<vmem>>, %arg5: memref<512x256xbf16, #tpu.memory_space<vmem>>, %arg6: memref<1x256xf32, #tpu.memory_space<vmem>>, %arg7: memref<128x512xbf16, #tpu.memory_space<vmem>>, %arg8: memref<1x512xf32, #tpu.memory_space<vmem>>, %arg9: memref<512x128xbf16, #tpu.memory_space<vmem>>, %arg10: memref<1x128xf32, #tpu.memory_space<vmem>>, %arg11: memref<8x128xbf16, #tpu.memory_space<vmem>>, %arg12: memref<8x256xf32, #tpu.memory_space<vmem>>) attributes {dimension_semantics = [#tpu.dimension_semantics<parallel>], iteration_bounds = array<i64: 1>, scalar_prefetch = 0 : i64, scratch_operands = 0 : i64, tpu.core_type = #tpu.core_type<tc>, window_params = [{transform_indices = @transform_0, window_bounds = array<i64: 8, 32>}, {transform_indices = @transform_1, window_bounds = array<i64: 8, 128>}, {pipeline_mode = #tpu.pipeline_mode<synchronous>, transform_indices = @transform_2, window_bounds = array<i64: 32, 512>}, {pipeline_mode = #tpu.pipeline_mode<synchronous>, transform_indices = @transform_3, window_bounds = array<i64: 1, 512>}, {pipeline_mode = #tpu.pipeline_mode<synchronous>, transform_indices = @transform_4, window_bounds = array<i64: 512, 256>}, {pipeline_mode = #tpu.pipeline_mode<synchronous>, transform_indices = @transform_5, window_bounds = array<i64: 1, 256>}, {pipeline_mode = #tpu.pipeline_mode<synchronous>, transform_indices = @transform_6, window_bounds = array<i64: 128, 512>}, {pipeline_mode = #tpu.pipeline_mode<synchronous>, transform_indices = @transform_7, window_bounds = array<i64: 1, 512>}, {pipeline_mode = #tpu.pipeline_mode<synchronous>, transform_indices = @transform_8, window_bounds = array<i64: 512, 128>}, {pipeline_mode = #tpu.pipeline_mode<synchronous>, transform_indices = @transform_9, window_bounds = array<i64: 1, 128>}, {transform_indices = @transform_10, window_bounds = array<i64: 8, 128>}, {transform_indices = @transform_11, window_bounds = array<i64: 8, 256>}]} {
    %c0 = arith.constant 0 : index
    %c0_0 = arith.constant 0 : index
    %0 = vector.load %arg1[%c0, %c0_0] : memref<8x32xf32, #tpu.memory_space<vmem>>, vector<8x32xf32>
    %1 = arith.truncf %0 : vector<8x32xf32> to vector<8x32xbf16>
    %c0_1 = arith.constant 0 : index
    %c0_2 = arith.constant 0 : index
    %2 = vector.load %arg3[%c0_1, %c0_2] : memref<32x512xbf16, #tpu.memory_space<vmem>>, vector<32x512xbf16>
    %cst = arith.constant dense<0.000000e+00> : vector<8x512xf32>
    %3 = tpu.matmul %1, %2, %cst {dimension_numbers = #tpu.dot_dimension_numbers<[1], [0], [0], [1], [0, 0, 1, 1], [], []>} : vector<8x32xbf16>, vector<32x512xbf16>, vector<8x512xf32> -> vector<8x512xf32>
    %c0_3 = arith.constant 0 : index
    %c0_4 = arith.constant 0 : index
    %4 = vector.load %arg4[%c0_3, %c0_4] : memref<1x512xf32, #tpu.memory_space<vmem>>, vector<1x512xf32>
    %5 = vector.broadcast %4 : vector<1x512xf32> to vector<8x512xf32>
    %6 = arith.addf %3, %5 : vector<8x512xf32>
    %cst_5 = arith.constant 0.000000e+00 : f32
    %7 = vector.broadcast %cst_5 : f32 to vector<8x512xf32>
    %8 = arith.maximumf %6, %7 : vector<8x512xf32>
    %9 = arith.truncf %8 : vector<8x512xf32> to vector<8x512xbf16>
    %c0_6 = arith.constant 0 : index
    %c0_7 = arith.constant 0 : index
    %10 = vector.load %arg5[%c0_6, %c0_7] : memref<512x256xbf16, #tpu.memory_space<vmem>>, vector<512x256xbf16>
    %cst_8 = arith.constant dense<0.000000e+00> : vector<8x256xf32>
    %11 = tpu.matmul %9, %10, %cst_8 {dimension_numbers = #tpu.dot_dimension_numbers<[1], [0], [0], [1], [0, 0, 1, 1], [], []>} : vector<8x512xbf16>, vector<512x256xbf16>, vector<8x256xf32> -> vector<8x256xf32>
    %c0_9 = arith.constant 0 : index
    %c0_10 = arith.constant 0 : index
    %12 = vector.load %arg6[%c0_9, %c0_10] : memref<1x256xf32, #tpu.memory_space<vmem>>, vector<1x256xf32>
    %13 = vector.broadcast %12 : vector<1x256xf32> to vector<8x256xf32>
    %14 = arith.addf %11, %13 : vector<8x256xf32>
    %15 = vector.extract_strided_slice %14 {offsets = [0, 0], sizes = [8, 128], strides = [1, 1]} : vector<8x256xf32> to vector<8x128xf32>
    %16 = vector.extract_strided_slice %14 {offsets = [0, 128], sizes = [8, 128], strides = [1, 1]} : vector<8x256xf32> to vector<8x128xf32>
    %cst_11 = arith.constant 5.000000e-01 : f32
    %17 = vector.broadcast %cst_11 : f32 to vector<8x128xf32>
    %18 = arith.mulf %17, %16 : vector<8x128xf32>
    %19 = math.exp %18 : vector<8x128xf32>
    %c0_12 = arith.constant 0 : index
    %c0_13 = arith.constant 0 : index
    %20 = vector.load %arg2[%c0_12, %c0_13] : memref<8x128xbf16, #tpu.memory_space<vmem>>, vector<8x128xbf16>
    %21 = arith.extf %20 : vector<8x128xbf16> to vector<8x128xf32>
    %22 = arith.mulf %21, %19 : vector<8x128xf32>
    %23 = arith.addf %22, %15 : vector<8x128xf32>
    %24 = arith.truncf %23 : vector<8x128xf32> to vector<8x128xbf16>
    %c0_14 = arith.constant 0 : index
    %c0_15 = arith.constant 0 : index
    %25 = vector.load %arg7[%c0_14, %c0_15] : memref<128x512xbf16, #tpu.memory_space<vmem>>, vector<128x512xbf16>
    %cst_16 = arith.constant dense<0.000000e+00> : vector<8x512xf32>
    %26 = tpu.matmul %24, %25, %cst_16 {dimension_numbers = #tpu.dot_dimension_numbers<[1], [0], [0], [1], [0, 0, 1, 1], [], []>} : vector<8x128xbf16>, vector<128x512xbf16>, vector<8x512xf32> -> vector<8x512xf32>
    %c0_17 = arith.constant 0 : index
    %c0_18 = arith.constant 0 : index
    %27 = vector.load %arg8[%c0_17, %c0_18] : memref<1x512xf32, #tpu.memory_space<vmem>>, vector<1x512xf32>
    %28 = vector.broadcast %27 : vector<1x512xf32> to vector<8x512xf32>
    %29 = arith.addf %26, %28 : vector<8x512xf32>
    %cst_19 = arith.constant 0.000000e+00 : f32
    %30 = vector.broadcast %cst_19 : f32 to vector<8x512xf32>
    %31 = arith.maximumf %29, %30 : vector<8x512xf32>
    %32 = arith.truncf %31 : vector<8x512xf32> to vector<8x512xbf16>
    %c0_20 = arith.constant 0 : index
    %c0_21 = arith.constant 0 : index
    %33 = vector.load %arg9[%c0_20, %c0_21] : memref<512x128xbf16, #tpu.memory_space<vmem>>, vector<512x128xbf16>
    %cst_22 = arith.constant dense<0.000000e+00> : vector<8x128xf32>
    %34 = tpu.matmul %32, %33, %cst_22 {dimension_numbers = #tpu.dot_dimension_numbers<[1], [0], [0], [1], [0, 0, 1, 1], [], []>} : vector<8x512xbf16>, vector<512x128xbf16>, vector<8x128xf32> -> vector<8x128xf32>
    %c0_23 = arith.constant 0 : index
    %c0_24 = arith.constant 0 : index
    %35 = vector.load %arg10[%c0_23, %c0_24] : memref<1x128xf32, #tpu.memory_space<vmem>>, vector<1x128xf32>
    %36 = vector.broadcast %35 : vector<1x128xf32> to vector<8x128xf32>
    %37 = arith.addf %34, %36 : vector<8x128xf32>
    %38 = arith.negf %37 : vector<8x128xf32>
    %39 = math.exp %38 : vector<8x128xf32>
    %cst_25 = arith.constant 1.000000e+00 : f32
    %40 = vector.broadcast %cst_25 : f32 to vector<8x128xf32>
    %41 = arith.addf %40, %39 : vector<8x128xf32>
    %42 = arith.divf %40, %41 : vector<8x128xf32>
    %43 = arith.truncf %42 : vector<8x128xf32> to vector<8x128xbf16>
    %c0_26 = arith.constant 0 : index
    %c0_27 = arith.constant 0 : index
    %44 = vector.load %arg11[%c0_26, %c0_27] : memref<8x128xbf16, #tpu.memory_space<vmem>>, vector<8x128xbf16>
    tpu.vector_store %arg11[%c0_26, %c0_27], %43 {strides = array<i32>} : memref<8x128xbf16, #tpu.memory_space<vmem>>, vector<8x128xbf16>,
    %c0_28 = arith.constant 0 : index
    %c0_29 = arith.constant 0 : index
    %45 = vector.load %arg12[%c0_28, %c0_29] : memref<8x256xf32, #tpu.memory_space<vmem>>, vector<8x256xf32>
    tpu.vector_store %arg12[%c0_28, %c0_29], %14 {strides = array<i32>} : memref<8x256xf32, #tpu.memory_space<vmem>>, vector<8x256xf32>,
    return
  }
  func.func @transform_0(%arg0: i32) -> (i32, i32) {
    %c0_i32 = arith.constant 0 : i32
    %c0_i32_0 = arith.constant 0 : i32
    return %arg0, %c0_i32 : i32, i32
  }
  func.func @transform_1(%arg0: i32) -> (i32, i32) {
    %c0_i32 = arith.constant 0 : i32
    %c0_i32_0 = arith.constant 0 : i32
    return %arg0, %c0_i32 : i32, i32
  }
  func.func @transform_2(%arg0: i32) -> (i32, i32) {
    %c0_i32 = arith.constant 0 : i32
    %c0_i32_0 = arith.constant 0 : i32
    %c0_i32_1 = arith.constant 0 : i32
    return %c0_i32, %c0_i32_0 : i32, i32
  }
  func.func @transform_3(%arg0: i32) -> (i32, i32) {
    %c0_i32 = arith.constant 0 : i32
    %c0_i32_0 = arith.constant 0 : i32
    %c0_i32_1 = arith.constant 0 : i32
    return %c0_i32, %c0_i32_0 : i32, i32
  }
  func.func @transform_4(%arg0: i32) -> (i32, i32) {
    %c0_i32 = arith.constant 0 : i32
    %c0_i32_0 = arith.constant 0 : i32
    %c0_i32_1 = arith.constant 0 : i32
    return %c0_i32, %c0_i32_0 : i32, i32
  }
  func.func @transform_5(%arg0: i32) -> (i32, i32) {
    %c0_i32 = arith.constant 0 : i32
    %c0_i32_0 = arith.constant 0 : i32
    %c0_i32_1 = arith.constant 0 : i32
    return %c0_i32, %c0_i32_0 : i32, i32
  }
  func.func @transform_6(%arg0: i32) -> (i32, i32) {
    %c0_i32 = arith.constant 0 : i32
    %c0_i32_0 = arith.constant 0 : i32
    %c0_i32_1 = arith.constant 0 : i32
    return %c0_i32, %c0_i32_0 : i32, i32
  }
  func.func @transform_7(%arg0: i32) -> (i32, i32) {
    %c0_i32 = arith.constant 0 : i32
    %c0_i32_0 = arith.constant 0 : i32
    %c0_i32_1 = arith.constant 0 : i32
    return %c0_i32, %c0_i32_0 : i32, i32
  }
  func.func @transform_8(%arg0: i32) -> (i32, i32) {
    %c0_i32 = arith.constant 0 : i32
    %c0_i32_0 = arith.constant 0 : i32
    %c0_i32_1 = arith.constant 0 : i32
    return %c0_i32, %c0_i32_0 : i32, i32
  }
  func.func @transform_9(%arg0: i32) -> (i32, i32) {
    %c0_i32 = arith.constant 0 : i32
    %c0_i32_0 = arith.constant 0 : i32
    %c0_i32_1 = arith.constant 0 : i32
    return %c0_i32, %c0_i32_0 : i32, i32
  }
  func.func @transform_10(%arg0: i32) -> (i32, i32) {
    %c0_i32 = arith.constant 0 : i32
    %c0_i32_0 = arith.constant 0 : i32
    return %arg0, %c0_i32 : i32, i32
  }
  func.func @transform_11(%arg0: i32) -> (i32, i32) {
    %c0_i32 = arith.constant 0 : i32
    %c0_i32_0 = arith.constant 0 : i32
    return %arg0, %c0_i32 : i32, i32
  }
}

</mosaic_0001>

<llo_original>
// kernel: vae_forward.1
$region0: #{vae_forward.1}
  #allocation0 [shape = 'u32[]', space=smem, size = 0x4, offset = 0x4, fixed_abs, tag = 'smem constant byte address 0x4 - core index']
  #allocation1 [shape = 'u32[72,128]{1,0:T(1,128)}', space=vmem, size = 0x9000, scoped, tag = 'internal scratch']
  %s0 = inlined_call_operand.vmem [shape: f32[8,32], index: 0, kind: input, shape index: {}]
  %s1 = inlined_call_operand.vmem [shape: bf16[8,128], index: 1, kind: input, shape index: {}]
  %s2 = inlined_call_operand.hbm [shape: bf16[32,512], index: 2, kind: input, shape index: {}]
  %s3 = inlined_call_operand.hbm [shape: f32[1,512], index: 3, kind: input, shape index: {}]
  %s4 = inlined_call_operand.hbm [shape: bf16[512,256], index: 4, kind: input, shape index: {}]
  %s5 = inlined_call_operand.hbm [shape: f32[1,256], index: 5, kind: input, shape index: {}]
  %s6 = inlined_call_operand.hbm [shape: bf16[128,512], index: 6, kind: input, shape index: {}]
  %s7 = inlined_call_operand.vmem [shape: f32[1,512], index: 7, kind: input, shape index: {}]
  %s8 = inlined_call_operand.hbm [shape: bf16[512,128], index: 8, kind: input, shape index: {}]
  %s9 = inlined_call_operand.vmem [shape: f32[1,128], index: 9, kind: input, shape index: {}]
  %s10 = inlined_call_operand.hbm [shape: bf16[8,128], index: 10, kind: output, shape index: {0}]
  %s11 = inlined_call_operand.vmem [shape: f32[8,256], index: 11, kind: output, shape index: {1}]
  %12 = xla_tuple %s10, %s11
  %s13 = sld [smem:[#allocation0]]
  $region82: #{vae_forward.1} parent=0
    _
  %s15 = ssub.s32 1, %s13
  %s16 = scalar_select 0, %s15, %s13
  $region1: #{vae_forward.1} parent=0
    #allocation2 [shape = 'u8[32768]{0}', space=vmem, size = 0x8000, scoped, tag = 'input window, operand 2, single buffered']
    #allocation3 [shape = 's32[1]{0}', space=sflag, size = 0x4, scoped, tag = 'scoped memory for vae_forward.1']
    #allocation4 [shape = 's32[1]{0}', space=sflag, size = 0x4, scoped, tag = 'scoped memory for vae_forward.1']
    #allocation5 [shape = 'u8[2048]{0}', space=vmem, size = 0x800, scoped, tag = 'input window, operand 3, single buffered']
    #allocation6 [shape = 's32[1]{0}', space=sflag, size = 0x4, scoped, tag = 'scoped memory for vae_forward.1']
    #allocation7 [shape = 'u8[262144]{0}', space=vmem, size = 0x40000, scoped, tag = 'input window, operand 4, single buffered']
    #allocation8 [shape = 'u8[1024]{0}', space=vmem, size = 0x400, scoped, tag = 'input window, operand 5, single buffered']
    #allocation9 [shape = 's32[1]{0}', space=sflag, size = 0x4, scoped, tag = 'scoped memory for vae_forward.1']
    #allocation10 [shape = 'u8[131072]{0}', space=vmem, size = 0x20000, scoped, tag = 'input window, operand 6, single buffered']
    #allocation11 [shape = 'u8[131072]{0}', space=vmem, size = 0x20000, scoped, tag = 'input window, operand 8, single buffered']
    #allocation12 [shape = 's32[1]{0}', space=sflag, size = 0x4, scoped, tag = 'scoped memory for vae_forward.1']
    #allocation13 [shape = 'u8[2048]{0}', space=vmem, size = 0x800, scoped, tag = 'output window, operand 0, single buffered']
    %17 = vsyncpa [#allocation3], 0
    %18 = vsyncpa [#allocation6], 0
    %19 = vsyncpa [#allocation9], 0
    %20 = vsyncpa [#allocation12], 0
    %21 = vsyncpa [#allocation4], 0
    // Predicated region
    $region2: #{vae_forward.1} parent=1 // pred_check
      _
    $region3: #{vae_forward.1} parent=1 // pred_check_branch
      %23 = sbr.rel (0) target = $region5
    $region4: #{vae_forward.1} parent=1 // pred_region
      _
    $region5: #{vae_forward.1} parent=1 // pred_fallthru
      _
    // Predicated region
    $region6: #{vae_forward.1} parent=1 // pred_check
      _
    $region7: #{vae_forward.1} parent=1 // pred_check_branch
      %25 = sbr.rel (0) target = $region9
    $region8: #{vae_forward.1} parent=1 // pred_region
      _
    $region9: #{vae_forward.1} parent=1 // pred_fallthru
      _
    // Predicated region
    $region10: #{vae_forward.1} parent=1 // pred_check
      _
    $region11: #{vae_forward.1} parent=1 // pred_check_branch
      %27 = sbr.rel (0) target = $region13
    $region12: #{vae_forward.1} parent=1 // pred_region
      %29 = vsyncadd [#allocation3], 0
      %s30 = sshll.u32 %s2, 4
      %s31 = int_to_ptr.hbm [resolvable:$true] %s30
      %s32 = sshll.u32 [#allocation2], 4
      %s33 = int_to_ptr.vmem [resolvable:$true] %s32
      %38 = dma.hbm_to_vmem [thread:$0]  %s31, 1024, %s33, [#allocation3], 256, 256, 16
    $region13: #{vae_forward.1} parent=1 // pred_fallthru
      _
    // Predicated region
    $region14: #{vae_forward.1} parent=1 // pred_check
      _
    $region15: #{vae_forward.1} parent=1 // pred_check_branch
      %40 = sbr.rel (0) target = $region17
    $region16: #{vae_forward.1} parent=1 // pred_region
      %42 = vsyncadd [#allocation6], 0
      %s44 = sshll.u32 %s3, 4
      %s45 = int_to_ptr.hbm [resolvable:$true] %s44
      %s46 = sshll.u32 [#allocation5], 4
      %s47 = int_to_ptr.vmem [resolvable:$true] %s46
      %49 = dma.hbm_to_vmem [thread:$0]  %s45, 64, %s47, [#allocation6]
    $region17: #{vae_forward.1} parent=1 // pred_fallthru
      _
    // Predicated region
    $region18: #{vae_forward.1} parent=1 // pred_check
      _
    $region19: #{vae_forward.1} parent=1 // pred_check_branch
      %51 = sbr.rel (0) target = $region21
    $region20: #{vae_forward.1} parent=1 // pred_region
      %53 = vsyncadd [#allocation6], 0
      %s54 = sshll.u32 %s4, 4
      %s55 = int_to_ptr.hbm [resolvable:$true] %s54
      %s56 = sshll.u32 [#allocation7], 4
      %s57 = int_to_ptr.vmem [resolvable:$true] %s56
      %62 = dma.hbm_to_vmem [thread:$0]  %s55, 8192, %s57, [#allocation6], 128, 128, 8
    $region21: #{vae_forward.1} parent=1 // pred_fallthru
      _
    // Predicated region
    $region22: #{vae_forward.1} parent=1 // pred_check
      _
    $region23: #{vae_forward.1} parent=1 // pred_check_branch
      %64 = sbr.rel (0) target = $region25
    $region24: #{vae_forward.1} parent=1 // pred_region
      %66 = vsyncadd [#allocation9], 0
      %s68 = sshll.u32 %s5, 4
      %s69 = int_to_ptr.hbm [resolvable:$true] %s68
      %s70 = sshll.u32 [#allocation8], 4
      %s71 = int_to_ptr.vmem [resolvable:$true] %s70
      %73 = dma.hbm_to_vmem [thread:$0]  %s69, 32, %s71, [#allocation9]
    $region25: #{vae_forward.1} parent=1 // pred_fallthru
      _
    // Predicated region
    $region26: #{vae_forward.1} parent=1 // pred_check
      _
    $region27: #{vae_forward.1} parent=1 // pred_check_branch
      %75 = sbr.rel (0) target = $region29
    $region28: #{vae_forward.1} parent=1 // pred_region
      %77 = vsyncadd [#allocation9], 0
      %s78 = sshll.u32 %s6, 4
      %s79 = int_to_ptr.hbm [resolvable:$true] %s78
      %s80 = sshll.u32 [#allocation10], 4
      %s81 = int_to_ptr.vmem [resolvable:$true] %s80
      %86 = dma.hbm_to_vmem [thread:$0]  %s79, 4096, %s81, [#allocation9], 256, 256, 16
    $region29: #{vae_forward.1} parent=1 // pred_fallthru
      _
    // Predicated region
    $region30: #{vae_forward.1} parent=1 // pred_check
      _
    $region31: #{vae_forward.1} parent=1 // pred_check_branch
      %88 = sbr.rel (0) target = $region33
    $region32: #{vae_forward.1} parent=1 // pred_region
      _
    $region33: #{vae_forward.1} parent=1 // pred_fallthru
      _
    // Predicated region
    $region34: #{vae_forward.1} parent=1 // pred_check
      _
    $region35: #{vae_forward.1} parent=1 // pred_check_branch
      %90 = sbr.rel (0) target = $region37
    $region36: #{vae_forward.1} parent=1 // pred_region
      %92 = vsyncadd [#allocation12], 0
      %s93 = sshll.u32 %s8, 4
      %s94 = int_to_ptr.hbm [resolvable:$true] %s93
      %s95 = sshll.u32 [#allocation11], 4
      %s96 = int_to_ptr.vmem [resolvable:$true] %s95
      %101 = dma.hbm_to_vmem [thread:$0]  %s94, 4096, %s96, [#allocation12], 64, 64, 4
    $region37: #{vae_forward.1} parent=1 // pred_fallthru
      _
    // Predicated region
    $region38: #{vae_forward.1} parent=1 // pred_check
      _
    $region39: #{vae_forward.1} parent=1 // pred_check_branch
      %103 = sbr.rel (0) target = $region41
    $region40: #{vae_forward.1} parent=1 // pred_region
      _
    $region41: #{vae_forward.1} parent=1 // pred_fallthru
      _
    // Predicated region
    $region42: #{vae_forward.1} parent=1 // pred_check
      _
    $region43: #{vae_forward.1} parent=1 // pred_check_branch
      %105 = sbr.rel (0) target = $region45
    $region44: #{vae_forward.1} parent=1 // pred_region
      %107 = dma.done [#allocation3], 1024
    $region45: #{vae_forward.1} parent=1 // pred_fallthru
      _
    // Predicated region
    $region46: #{vae_forward.1} parent=1 // pred_check
      _
    $region47: #{vae_forward.1} parent=1 // pred_check_branch
      %109 = sbr.rel (0) target = $region49
    $region48: #{vae_forward.1} parent=1 // pred_region
      %111 = dma.done [#allocation6], 64
    $region49: #{vae_forward.1} parent=1 // pred_fallthru
      _
    // Predicated region
    $region50: #{vae_forward.1} parent=1 // pred_check
      _
    $region51: #{vae_forward.1} parent=1 // pred_check_branch
      %113 = sbr.rel (0) target = $region53
    $region52: #{vae_forward.1} parent=1 // pred_region
      %115 = dma.done [#allocation6], 8192
    $region53: #{vae_forward.1} parent=1 // pred_fallthru
      _
    // Predicated region
    $region54: #{vae_forward.1} parent=1 // pred_check
      _
    $region55: #{vae_forward.1} parent=1 // pred_check_branch
      %117 = sbr.rel (0) target = $region57
    $region56: #{vae_forward.1} parent=1 // pred_region
      %119 = dma.done [#allocation9], 32
    $region57: #{vae_forward.1} parent=1 // pred_fallthru
      _
    // Predicated region
    $region58: #{vae_forward.1} parent=1 // pred_check
      _
    $region59: #{vae_forward.1} parent=1 // pred_check_branch
      %121 = sbr.rel (0) target = $region61
    $region60: #{vae_forward.1} parent=1 // pred_region
      %123 = dma.done [#allocation9], 4096
    $region61: #{vae_forward.1} parent=1 // pred_fallthru
      _
    // Predicated region
    $region62: #{vae_forward.1} parent=1 // pred_check
      _
    $region63: #{vae_forward.1} parent=1 // pred_check_branch
      %125 = sbr.rel (0) target = $region65
    $region64: #{vae_forward.1} parent=1 // pred_region
      %127 = dma.done [#allocation12], 4096
    $region65: #{vae_forward.1} parent=1 // pred_fallthru
      _
    %v129 = vld [vmem:[%s0] sm:$0xff]
    %v130 = vpack.c.bf16 %v129, %v129
    %v131 = vld [vmem:[#allocation2] sm:$0xff]
    %v132 = vld [vmem:[#allocation2 + $0x8] sm:$0xff]
    %v133 = vld [vmem:[#allocation2 + $0x10] sm:$0xff]
    %v134 = vld [vmem:[#allocation2 + $0x18] sm:$0xff]
    %v135 = vld [vmem:[#allocation2 + $0x20] sm:$0xff]
    %v136 = vld [vmem:[#allocation2 + $0x28] sm:$0xff]
    %v137 = vld [vmem:[#allocation2 + $0x30] sm:$0xff]
    %v138 = vld [vmem:[#allocation2 + $0x38] sm:$0xff]
    %v139 = vld [vmem:[#allocation5] sm:$0xf]
    %v141 = vperm.slane %v139, 0
    %v142 = vperm.slane %v139, 1
    %v143 = vperm.slane %v139, 2
    %v144 = vperm.slane %v139, 3
    %v157 = vunpack.c.l.b16 %v131
    %v158 = vunpack.c.h.b16 %v131
    %v159 = vunpack.c.l.b16 %v132
    %v160 = vunpack.c.h.b16 %v132
    %v161 = vunpack.c.l.b16 %v133
    %v162 = vunpack.c.h.b16 %v133
    %v163 = vunpack.c.l.b16 %v134
    %v164 = vunpack.c.h.b16 %v134
    %v165 = vunpack.c.l.b16 %v135
    %v166 = vunpack.c.h.b16 %v135
    %v167 = vunpack.c.l.b16 %v136
    %v168 = vunpack.c.h.b16 %v136
    %v169 = vunpack.c.l.b16 %v137
    %v170 = vunpack.c.h.b16 %v137
    %v171 = vunpack.c.l.b16 %v138
    %v172 = vunpack.c.h.b16 %v138
    %v173 = vpack.c.b16 %v161, %v157
    %v174 = vpack.c.b16 %v162, %v158
    %v175 = vpack.c.b16 %v163, %v159
    %v176 = vpack.c.b16 %v164, %v160
    %v177 = vpack.c.b16 %v169, %v165
    %v178 = vpack.c.b16 %v170, %v166
    %v179 = vpack.c.b16 %v171, %v167
    %v180 = vpack.c.b16 %v172, %v168
    %vm189 = vcmask 261120
    %v191 = vsel %vm189, %v130, 0
    %193 = vmatpush.bf16.msra.mxu0 0
    %194 = vmatpush.bf16.msra.mxu0 0
    %195 = vmatpush.bf16.msra.mxu0 0
    %196 = vmatpush.bf16.msra.mxu0 0
    %197 = vmatpush.bf16.msra.mxu0 0
    %198 = vmatpush.bf16.msra.mxu0 0
    %199 = vmatpush.bf16.msra.mxu0 %v177
    %200 = vmatpush.bf16.msra.mxu0 %v173
    %201 = vmatmul.bf16.gmra.mxu0 %v191
    %v202 = vpop.f32.mrf.mxu0
    %v203 = vadd.f32 %v141, %v202
    %v204 = vpop.f32.mrf.mxu0
    %205 = vdwg.mxu0
    %206 = vmatpush.bf16.msra.mxu0 0
    %207 = vmatpush.bf16.msra.mxu0 0
    %208 = vmatpush.bf16.msra.mxu0 0
    %209 = vmatpush.bf16.msra.mxu0 0
    %210 = vmatpush.bf16.msra.mxu0 0
    %211 = vmatpush.bf16.msra.mxu0 0
    %212 = vmatpush.bf16.msra.mxu0 %v178
    %213 = vmatpush.bf16.msra.mxu0 %v174
    %214 = vmatmul.bf16.gmra.mxu0 %v191
    %v215 = vpop.f32.mrf.mxu0
    %v216 = vadd.f32 %v142, %v215
    %v217 = vpop.f32.mrf.mxu0
    %218 = vdwg.mxu0
    %219 = vmatpush.bf16.msra.mxu0 0
    %220 = vmatpush.bf16.msra.mxu0 0
    %221 = vmatpush.bf16.msra.mxu0 0
    %222 = vmatpush.bf16.msra.mxu0 0
    %223 = vmatpush.bf16.msra.mxu0 0
    %224 = vmatpush.bf16.msra.mxu0 0
    %225 = vmatpush.bf16.msra.mxu0 %v179
    %226 = vmatpush.bf16.msra.mxu0 %v175
    %227 = vmatmul.bf16.gmra.mxu0 %v191
    %v228 = vpop.f32.mrf.mxu0
    %v229 = vadd.f32 %v143, %v228
    %v230 = vpop.f32.mrf.mxu0
    %231 = vdwg.mxu0
    %232 = vmatpush.bf16.msra.mxu0 0
    %233 = vmatpush.bf16.msra.mxu0 0
    %234 = vmatpush.bf16.msra.mxu0 0
    %235 = vmatpush.bf16.msra.mxu0 0
    %236 = vmatpush.bf16.msra.mxu0 0
    %237 = vmatpush.bf16.msra.mxu0 0
    %238 = vmatpush.bf16.msra.mxu0 %v180
    %239 = vmatpush.bf16.msra.mxu0 %v176
    %240 = vmatmul.bf16.gmra.mxu0 %v191
    %v241 = vpop.f32.mrf.mxu0
    %v242 = vadd.f32 %v144, %v241
    %v243 = vpop.f32.mrf.mxu0
    %244 = vdwg.mxu0
    %v245 = vmax.f32 %v203, 0.0
    %v246 = vmax.f32 %v216, 0.0
    %v247 = vmax.f32 %v229, 0.0
    %v248 = vmax.f32 %v242, 0.0
    %v249 = vpack.c.bf16 %v245, %v245
    %v250 = vpack.c.bf16 %v246, %v246
    %v251 = vpack.c.bf16 %v247, %v247
    %v252 = vpack.c.bf16 %v248, %v248
    %v253 = vld [vmem:[#allocation7] sm:$0xff]
    %v254 = vld [vmem:[#allocation7 + $0x8] sm:$0xff]
    %v255 = vld [vmem:[#allocation7 + $0x10] sm:$0xff]
    %v256 = vld [vmem:[#allocation7 + $0x18] sm:$0xff]
    %v257 = vld [vmem:[#allocation7 + $0x20] sm:$0xff]
    %v258 = vld [vmem:[#allocation7 + $0x28] sm:$0xff]
    %v259 = vld [vmem:[#allocation7 + $0x30] sm:$0xff]
    %v260 = vld [vmem:[#allocation7 + $0x38] sm:$0xff]
    %v261 = vld [vmem:[#allocation7 + $0x40] sm:$0xff]
    %v262 = vld [vmem:[#allocation7 + $0x48] sm:$0xff]
    %v263 = vld [vmem:[#allocation7 + $0x50] sm:$0xff]
    %v264 = vld [vmem:[#allocation7 + $0x58] sm:$0xff]
    %v265 = vld [vmem:[#allocation7 + $0x60] sm:$0xff]
    %v266 = vld [vmem:[#allocation7 + $0x68] sm:$0xff]
    %v267 = vld [vmem:[#allocation7 + $0x70] sm:$0xff]
    %v268 = vld [vmem:[#allocation7 + $0x78] sm:$0xff]
    %v269 = vld [vmem:[#allocation7 + $0x80] sm:$0xff]
    %v270 = vld [vmem:[#allocation7 + $0x88] sm:$0xff]
    %v271 = vld [vmem:[#allocation7 + $0x90] sm:$0xff]
    %v272 = vld [vmem:[#allocation7 + $0x98] sm:$0xff]
    %v273 = vld [vmem:[#allocation7 + $0xa0] sm:$0xff]
    %v274 = vld [vmem:[#allocation7 + $0xa8] sm:$0xff]
    %v275 = vld [vmem:[#allocation7 + $0xb0] sm:$0xff]
    %v276 = vld [vmem:[#allocation7 + $0xb8] sm:$0xff]
    %v277 = vld [vmem:[#allocation7 + $0xc0] sm:$0xff]
    %v278 = vld [vmem:[#allocation7 + $0xc8] sm:$0xff]
    %v279 = vld [vmem:[#allocation7 + $0xd0] sm:$0xff]
    %v280 = vld [vmem:[#allocation7 + $0xd8] sm:$0xff]
    %v281 = vld [vmem:[#allocation7 + $0xe0] sm:$0xff]
    %v282 = vld [vmem:[#allocation7 + $0xe8] sm:$0xff]
    %v283 = vld [vmem:[#allocation7 + $0xf0] sm:$0xff]
    %v284 = vld [vmem:[#allocation7 + $0xf8] sm:$0xff]
    %v285 = vld [vmem:[#allocation7 + $0x100] sm:$0xff]
    %v286 = vld [vmem:[#allocation7 + $0x108] sm:$0xff]
    %v287 = vld [vmem:[#allocation7 + $0x110] sm:$0xff]
    %v288 = vld [vmem:[#allocation7 + $0x118] sm:$0xff]
    %v289 = vld [vmem:[#allocation7 + $0x120] sm:$0xff]
    %v290 = vld [vmem:[#allocation7 + $0x128] sm:$0xff]
    %v291 = vld [vmem:[#allocation7 + $0x130] sm:$0xff]
    %v292 = vld [vmem:[#allocation7 + $0x138] sm:$0xff]
    %v293 = vld [vmem:[#allocation7 + $0x140] sm:$0xff]
    %v294 = vld [vmem:[#allocation7 + $0x148] sm:$0xff]
    %v295 = vld [vmem:[#allocation7 + $0x150] sm:$0xff]
    %v296 = vld [vmem:[#allocation7 + $0x158] sm:$0xff]
    %v297 = vld [vmem:[#allocation7 + $0x160] sm:$0xff]
    %v298 = vld [vmem:[#allocation7 + $0x168] sm:$0xff]
    %v299 = vld [vmem:[#allocation7 + $0x170] sm:$0xff]
    %v300 = vld [vmem:[#allocation7 + $0x178] sm:$0xff]
    %v301 = vld [vmem:[#allocation7 + $0x180] sm:$0xff]
    %v302 = vld [vmem:[#allocation7 + $0x188] sm:$0xff]
    %v303 = vld [vmem:[#allocation7 + $0x190] sm:$0xff]
    %v304 = vld [vmem:[#allocation7 + $0x198] sm:$0xff]
    %v305 = vld [vmem:[#allocation7 + $0x1a0] sm:$0xff]
    %v306 = vld [vmem:[#allocation7 + $0x1a8] sm:$0xff]
    %v307 = vld [vmem:[#allocation7 + $0x1b0] sm:$0xff]
    %v308 = vld [vmem:[#allocation7 + $0x1b8] sm:$0xff]
    %v309 = vld [vmem:[#allocation7 + $0x1c0] sm:$0xff]
    %v310 = vld [vmem:[#allocation7 + $0x1c8] sm:$0xff]
    %v311 = vld [vmem:[#allocation7 + $0x1d0] sm:$0xff]
    %v312 = vld [vmem:[#allocation7 + $0x1d8] sm:$0xff]
    %v313 = vld [vmem:[#allocation7 + $0x1e0] sm:$0xff]
    %v314 = vld [vmem:[#allocation7 + $0x1e8] sm:$0xff]
    %v315 = vld [vmem:[#allocation7 + $0x1f0] sm:$0xff]
    %v316 = vld [vmem:[#allocation7 + $0x1f8] sm:$0xff]
    %v317 = vld [vmem:[#allocation8] sm:$0x3]
    %v319 = vperm.slane %v317, 0
    %v320 = vperm.slane %v317, 1
    %v387 = vunpack.c.l.b16 %v253
    %v388 = vunpack.c.h.b16 %v253
    %v389 = vunpack.c.l.b16 %v254
    %v390 = vunpack.c.h.b16 %v254
    %v391 = vunpack.c.l.b16 %v255
    %v392 = vunpack.c.h.b16 %v255
    %v393 = vunpack.c.l.b16 %v256
    %v394 = vunpack.c.h.b16 %v256
    %v395 = vunpack.c.l.b16 %v257
    %v396 = vunpack.c.h.b16 %v257
    %v397 = vunpack.c.l.b16 %v258
    %v398 = vunpack.c.h.b16 %v258
    %v399 = vunpack.c.l.b16 %v259
    %v400 = vunpack.c.h.b16 %v259
    %v401 = vunpack.c.l.b16 %v260
    %v402 = vunpack.c.h.b16 %v260
    %v403 = vunpack.c.l.b16 %v261
    %v404 = vunpack.c.h.b16 %v261
    %v405 = vunpack.c.l.b16 %v262
    %v406 = vunpack.c.h.b16 %v262
    %v407 = vunpack.c.l.b16 %v263
    %v408 = vunpack.c.h.b16 %v263
    %v409 = vunpack.c.l.b16 %v264
    %v410 = vunpack.c.h.b16 %v264
    %v411 = vunpack.c.l.b16 %v265
    %v412 = vunpack.c.h.b16 %v265
    %v413 = vunpack.c.l.b16 %v266
    %v414 = vunpack.c.h.b16 %v266
    %v415 = vunpack.c.l.b16 %v267
    %v416 = vunpack.c.h.b16 %v267
    %v417 = vunpack.c.l.b16 %v268
    %v418 = vunpack.c.h.b16 %v268
    %v419 = vunpack.c.l.b16 %v269
    %v420 = vunpack.c.h.b16 %v269
    %v421 = vunpack.c.l.b16 %v270
    %v422 = vunpack.c.h.b16 %v270
    %v423 = vunpack.c.l.b16 %v271
    %v424 = vunpack.c.h.b16 %v271
    %v425 = vunpack.c.l.b16 %v272
    %v426 = vunpack.c.h.b16 %v272
    %v427 = vunpack.c.l.b16 %v273
    %v428 = vunpack.c.h.b16 %v273
    %v429 = vunpack.c.l.b16 %v274
    %v430 = vunpack.c.h.b16 %v274
    %v431 = vunpack.c.l.b16 %v275
    %v432 = vunpack.c.h.b16 %v275
    %v433 = vunpack.c.l.b16 %v276
    %v434 = vunpack.c.h.b16 %v276
    %v435 = vunpack.c.l.b16 %v277
    %v436 = vunpack.c.h.b16 %v277
    %v437 = vunpack.c.l.b16 %v278
    %v438 = vunpack.c.h.b16 %v278
    %v439 = vunpack.c.l.b16 %v279
    %v440 = vunpack.c.h.b16 %v279
    %v441 = vunpack.c.l.b16 %v280
    %v442 = vunpack.c.h.b16 %v280
    %v443 = vunpack.c.l.b16 %v281
    %v444 = vunpack.c.h.b16 %v281
    %v445 = vunpack.c.l.b16 %v282
    %v446 = vunpack.c.h.b16 %v282
    %v447 = vunpack.c.l.b16 %v283
    %v448 = vunpack.c.h.b16 %v283
    %v449 = vunpack.c.l.b16 %v284
    %v450 = vunpack.c.h.b16 %v284
    %v451 = vunpack.c.l.b16 %v285
    %v452 = vunpack.c.h.b16 %v285
    %v453 = vunpack.c.l.b16 %v286
    %v454 = vunpack.c.h.b16 %v286
    %v455 = vunpack.c.l.b16 %v287
    %v456 = vunpack.c.h.b16 %v287
    %v457 = vunpack.c.l.b16 %v288
    %v458 = vunpack.c.h.b16 %v288
    %v459 = vunpack.c.l.b16 %v289
    %v460 = vunpack.c.h.b16 %v289
    %v461 = vunpack.c.l.b16 %v290
    %v462 = vunpack.c.h.b16 %v290
    %v463 = vunpack.c.l.b16 %v291
    %v464 = vunpack.c.h.b16 %v291
    %v465 = vunpack.c.l.b16 %v292
    %v466 = vunpack.c.h.b16 %v292
    %v467 = vunpack.c.l.b16 %v293
    %v468 = vunpack.c.h.b16 %v293
    %v469 = vunpack.c.l.b16 %v294
    %v470 = vunpack.c.h.b16 %v294
    %v471 = vunpack.c.l.b16 %v295
    %v472 = vunpack.c.h.b16 %v295
    %v473 = vunpack.c.l.b16 %v296
    %v474 = vunpack.c.h.b16 %v296
    %v475 = vunpack.c.l.b16 %v297
    %v476 = vunpack.c.h.b16 %v297
    %v477 = vunpack.c.l.b16 %v298
    %v478 = vunpack.c.h.b16 %v298
    %v479 = vunpack.c.l.b16 %v299
    %v480 = vunpack.c.h.b16 %v299
    %v481 = vunpack.c.l.b16 %v300
    %v482 = vunpack.c.h.b16 %v300
    %v483 = vunpack.c.l.b16 %v301
    %v484 = vunpack.c.h.b16 %v301
    %v485 = vunpack.c.l.b16 %v302
    %v486 = vunpack.c.h.b16 %v302
    %v487 = vunpack.c.l.b16 %v303
    %v488 = vunpack.c.h.b16 %v303
    %v489 = vunpack.c.l.b16 %v304
    %v490 = vunpack.c.h.b16 %v304
    %v491 = vunpack.c.l.b16 %v305
    %v492 = vunpack.c.h.b16 %v305
    %v493 = vunpack.c.l.b16 %v306
    %v494 = vunpack.c.h.b16 %v306
    %v495 = vunpack.c.l.b16 %v307
    %v496 = vunpack.c.h.b16 %v307
    %v497 = vunpack.c.l.b16 %v308
    %v498 = vunpack.c.h.b16 %v308
    %v499 = vunpack.c.l.b16 %v309
    %v500 = vunpack.c.h.b16 %v309
    %v501 = vunpack.c.l.b16 %v310
    %v502 = vunpack.c.h.b16 %v310
    %v503 = vunpack.c.l.b16 %v311
    %v504 = vunpack.c.h.b16 %v311
    %v505 = vunpack.c.l.b16 %v312
    %v506 = vunpack.c.h.b16 %v312
    %v507 = vunpack.c.l.b16 %v313
    %v508 = vunpack.c.h.b16 %v313
    %v509 = vunpack.c.l.b16 %v314
    %v510 = vunpack.c.h.b16 %v314
    %v511 = vunpack.c.l.b16 %v315
    %v512 = vunpack.c.h.b16 %v315
    %v513 = vunpack.c.l.b16 %v316
    %v514 = vunpack.c.h.b16 %v316
    %v515 = vpack.c.b16 %v389, %v387
    %v516 = vpack.c.b16 %v390, %v388
    %v517 = vpack.c.b16 %v393, %v391
    %v518 = vpack.c.b16 %v394, %v392
    %v519 = vpack.c.b16 %v397, %v395
    %v520 = vpack.c.b16 %v398, %v396
    %v521 = vpack.c.b16 %v401, %v399
    %v522 = vpack.c.b16 %v402, %v400
    %v523 = vpack.c.b16 %v405, %v403
    %v524 = vpack.c.b16 %v406, %v404
    %v525 = vpack.c.b16 %v409, %v407
    %v526 = vpack.c.b16 %v410, %v408
    %v527 = vpack.c.b16 %v413, %v411
    %v528 = vpack.c.b16 %v414, %v412
    %v529 = vpack.c.b16 %v417, %v415
    %v530 = vpack.c.b16 %v418, %v416
    %v531 = vpack.c.b16 %v421, %v419
    %v532 = vpack.c.b16 %v422, %v420
    %v533 = vpack.c.b16 %v425, %v423
    %v534 = vpack.c.b16 %v426, %v424
    %v535 = vpack.c.b16 %v429, %v427
    %v536 = vpack.c.b16 %v430, %v428
    %v537 = vpack.c.b16 %v433, %v431
    %v538 = vpack.c.b16 %v434, %v432
    %v539 = vpack.c.b16 %v437, %v435
    %v540 = vpack.c.b16 %v438, %v436
    %v541 = vpack.c.b16 %v441, %v439
    %v542 = vpack.c.b16 %v442, %v440
    %v543 = vpack.c.b16 %v445, %v443
    %v544 = vpack.c.b16 %v446, %v444
    %v545 = vpack.c.b16 %v449, %v447
    %v546 = vpack.c.b16 %v450, %v448
    %v547 = vpack.c.b16 %v453, %v451
    %v548 = vpack.c.b16 %v454, %v452
    %v549 = vpack.c.b16 %v457, %v455
    %v550 = vpack.c.b16 %v458, %v456
    %v551 = vpack.c.b16 %v461, %v459
    %v552 = vpack.c.b16 %v462, %v460
    %v553 = vpack.c.b16 %v465, %v463
    %v554 = vpack.c.b16 %v466, %v464
    %v555 = vpack.c.b16 %v469, %v467
    %v556 = vpack.c.b16 %v470, %v468
    %v557 = vpack.c.b16 %v473, %v471
    %v558 = vpack.c.b16 %v474, %v472
    %v559 = vpack.c.b16 %v477, %v475
    %v560 = vpack.c.b16 %v478, %v476
    %v561 = vpack.c.b16 %v481, %v479
    %v562 = vpack.c.b16 %v482, %v480
    %v563 = vpack.c.b16 %v485, %v483
    %v564 = vpack.c.b16 %v486, %v484
    %v565 = vpack.c.b16 %v489, %v487
    %v566 = vpack.c.b16 %v490, %v488
    %v567 = vpack.c.b16 %v493, %v491
    %v568 = vpack.c.b16 %v494, %v492
    %v569 = vpack.c.b16 %v497, %v495
    %v570 = vpack.c.b16 %v498, %v496
    %v571 = vpack.c.b16 %v501, %v499
    %v572 = vpack.c.b16 %v502, %v500
    %v573 = vpack.c.b16 %v505, %v503
    %v574 = vpack.c.b16 %v506, %v504
    %v575 = vpack.c.b16 %v509, %v507
    %v576 = vpack.c.b16 %v510, %v508
    %v577 = vpack.c.b16 %v513, %v511
    %v578 = vpack.c.b16 %v514, %v512
    %643 = vmatpush.bf16.msra.mxu0 %v529
    %644 = vmatpush.bf16.msra.mxu0 %v527
    %645 = vmatpush.bf16.msra.mxu0 %v525
    %646 = vmatpush.bf16.msra.mxu0 %v523
    %647 = vmatpush.bf16.msra.mxu0 %v521
    %648 = vmatpush.bf16.msra.mxu0 %v519
    %649 = vmatpush.bf16.msra.mxu0 %v517
    %650 = vmatpush.bf16.msra.mxu0 %v515
    %651 = vmatmul.bf16.gmra.mxu0 %v249
    %v652 = vpop.f32.mrf.mxu0
    %v653 = vadd.f32 %v319, %v652
    %v654 = vpop.f32.mrf.mxu0
    %655 = vdwg.mxu0
    %656 = vmatpush.bf16.msra.mxu0 %v545
    %657 = vmatpush.bf16.msra.mxu0 %v543
    %658 = vmatpush.bf16.msra.mxu0 %v541
    %659 = vmatpush.bf16.msra.mxu0 %v539
    %660 = vmatpush.bf16.msra.mxu0 %v537
    %661 = vmatpush.bf16.msra.mxu0 %v535
    %662 = vmatpush.bf16.msra.mxu0 %v533
    %663 = vmatpush.bf16.msra.mxu0 %v531
    %664 = vmatmul.bf16.gmra.mxu0 %v250
    %v665 = vpop.f32.mrf.mxu0
    %v666 = vadd.f32 %v653, %v665
    %v667 = vpop.f32.mrf.mxu0
    %668 = vdwg.mxu0
    %669 = vmatpush.bf16.msra.mxu0 %v561
    %670 = vmatpush.bf16.msra.mxu0 %v559
    %671 = vmatpush.bf16.msra.mxu0 %v557
    %672 = vmatpush.bf16.msra.mxu0 %v555
    %673 = vmatpush.bf16.msra.mxu0 %v553
    %674 = vmatpush.bf16.msra.mxu0 %v551
    %675 = vmatpush.bf16.msra.mxu0 %v549
    %676 = vmatpush.bf16.msra.mxu0 %v547
    %677 = vmatmul.bf16.gmra.mxu0 %v251
    %v678 = vpop.f32.mrf.mxu0
    %v679 = vadd.f32 %v666, %v678
    %v680 = vpop.f32.mrf.mxu0
    %681 = vdwg.mxu0
    %682 = vmatpush.bf16.msra.mxu0 %v577
    %683 = vmatpush.bf16.msra.mxu0 %v575
    %684 = vmatpush.bf16.msra.mxu0 %v573
    %685 = vmatpush.bf16.msra.mxu0 %v571
    %686 = vmatpush.bf16.msra.mxu0 %v569
    %687 = vmatpush.bf16.msra.mxu0 %v567
    %688 = vmatpush.bf16.msra.mxu0 %v565
    %689 = vmatpush.bf16.msra.mxu0 %v563
    %690 = vmatmul.bf16.gmra.mxu0 %v252
    %v691 = vpop.f32.mrf.mxu0
    %v692 = vadd.f32 %v679, %v691
    %v693 = vpop.f32.mrf.mxu0
    %694 = vdwg.mxu0
    %695 = vmatpush.bf16.msra.mxu0 %v530
    %696 = vmatpush.bf16.msra.mxu0 %v528
    %697 = vmatpush.bf16.msra.mxu0 %v526
    %698 = vmatpush.bf16.msra.mxu0 %v524
    %699 = vmatpush.bf16.msra.mxu0 %v522
    %700 = vmatpush.bf16.msra.mxu0 %v520
    %701 = vmatpush.bf16.msra.mxu0 %v518
    %702 = vmatpush.bf16.msra.mxu0 %v516
    %703 = vmatmul.bf16.gmra.mxu0 %v249
    %v704 = vpop.f32.mrf.mxu0
    %v705 = vadd.f32 %v320, %v704
    %v706 = vpop.f32.mrf.mxu0
    %707 = vdwg.mxu0
    %708 = vmatpush.bf16.msra.mxu0 %v546
    %709 = vmatpush.bf16.msra.mxu0 %v544
    %710 = vmatpush.bf16.msra.mxu0 %v542
    %711 = vmatpush.bf16.msra.mxu0 %v540
    %712 = vmatpush.bf16.msra.mxu0 %v538
    %713 = vmatpush.bf16.msra.mxu0 %v536
    %714 = vmatpush.bf16.msra.mxu0 %v534
    %715 = vmatpush.bf16.msra.mxu0 %v532
    %716 = vmatmul.bf16.gmra.mxu0 %v250
    %v717 = vpop.f32.mrf.mxu0
    %v718 = vadd.f32 %v705, %v717
    %v719 = vpop.f32.mrf.mxu0
    %720 = vdwg.mxu0
    %721 = vmatpush.bf16.msra.mxu0 %v562
    %722 = vmatpush.bf16.msra.mxu0 %v560
    %723 = vmatpush.bf16.msra.mxu0 %v558
    %724 = vmatpush.bf16.msra.mxu0 %v556
    %725 = vmatpush.bf16.msra.mxu0 %v554
    %726 = vmatpush.bf16.msra.mxu0 %v552
    %727 = vmatpush.bf16.msra.mxu0 %v550
    %728 = vmatpush.bf16.msra.mxu0 %v548
    %729 = vmatmul.bf16.gmra.mxu0 %v251
    %v730 = vpop.f32.mrf.mxu0
    %v731 = vadd.f32 %v718, %v730
    %v732 = vpop.f32.mrf.mxu0
    %733 = vdwg.mxu0
    %734 = vmatpush.bf16.msra.mxu0 %v578
    %735 = vmatpush.bf16.msra.mxu0 %v576
    %736 = vmatpush.bf16.msra.mxu0 %v574
    %737 = vmatpush.bf16.msra.mxu0 %v572
    %738 = vmatpush.bf16.msra.mxu0 %v570
    %739 = vmatpush.bf16.msra.mxu0 %v568
    %740 = vmatpush.bf16.msra.mxu0 %v566
    %741 = vmatpush.bf16.msra.mxu0 %v564
    %742 = vmatmul.bf16.gmra.mxu0 %v252
    %v743 = vpop.f32.mrf.mxu0
    %v744 = vadd.f32 %v731, %v743
    %v745 = vpop.f32.mrf.mxu0
    %746 = vdwg.mxu0
    %v747 = vmul.f32 %v744, 0.5
    %v748 = vmul.f32 %v747, 1.442695
    %v749 = vpow.pop %v748
    %v750 = vld [vmem:[%s1] sm:$0xf]
    %v751 = vunpack.c.l.bf16 %v750
    %v752 = vmul.f32 %v751, %v749
    %v753 = vadd.f32 %v752, %v692
    %v754 = vpack.c.bf16 %v753, %v753
    %v755 = vld [vmem:[#allocation10] sm:$0xff]
    %v756 = vld [vmem:[#allocation10 + $0x8] sm:$0xff]
    %v757 = vld [vmem:[#allocation10 + $0x10] sm:$0xff]
    %v758 = vld [vmem:[#allocation10 + $0x18] sm:$0xff]
    %v759 = vld [vmem:[#allocation10 + $0x20] sm:$0xff]
    %v760 = vld [vmem:[#allocation10 + $0x28] sm:$0xff]
    %v761 = vld [vmem:[#allocation10 + $0x30] sm:$0xff]
    %v762 = vld [vmem:[#allocation10 + $0x38] sm:$0xff]
    %v763 = vld [vmem:[#allocation10 + $0x40] sm:$0xff]
    %v764 = vld [vmem:[#allocation10 + $0x48] sm:$0xff]
    %v765 = vld [vmem:[#allocation10 + $0x50] sm:$0xff]
    %v766 = vld [vmem:[#allocation10 + $0x58] sm:$0xff]
    %v767 = vld [vmem:[#allocation10 + $0x60] sm:$0xff]
    %v768 = vld [vmem:[#allocation10 + $0x68] sm:$0xff]
    %v769 = vld [vmem:[#allocation10 + $0x70] sm:$0xff]
    %v770 = vld [vmem:[#allocation10 + $0x78] sm:$0xff]
    %v771 = vld [vmem:[#allocation10 + $0x80] sm:$0xff]
    %v772 = vld [vmem:[#allocation10 + $0x88] sm:$0xff]
    %v773 = vld [vmem:[#allocation10 + $0x90] sm:$0xff]
    %v774 = vld [vmem:[#allocation10 + $0x98] sm:$0xff]
    %v775 = vld [vmem:[#allocation10 + $0xa0] sm:$0xff]
    %v776 = vld [vmem:[#allocation10 + $0xa8] sm:$0xff]
    %v777 = vld [vmem:[#allocation10 + $0xb0] sm:$0xff]
    %v778 = vld [vmem:[#allocation10 + $0xb8] sm:$0xff]
    %v779 = vld [vmem:[#allocation10 + $0xc0] sm:$0xff]
    %v780 = vld [vmem:[#allocation10 + $0xc8] sm:$0xff]
    %v781 = vld [vmem:[#allocation10 + $0xd0] sm:$0xff]
    %v782 = vld [vmem:[#allocation10 + $0xd8] sm:$0xff]
    %v783 = vld [vmem:[#allocation10 + $0xe0] sm:$0xff]
    %v784 = vld [vmem:[#allocation10 + $0xe8] sm:$0xff]
    %v785 = vld [vmem:[#allocation10 + $0xf0] sm:$0xff]
    %v786 = vld [vmem:[#allocation10 + $0xf8] sm:$0xff]
    %v787 = vld [vmem:[%s7] sm:$0xf]
    %v789 = vperm.slane %v787, 0
    %v790 = vperm.slane %v787, 1
    %v791 = vperm.slane %v787, 2
    %v792 = vperm.slane %v787, 3
    %v829 = vunpack.c.l.b16 %v755
    %v830 = vunpack.c.h.b16 %v755
    %v831 = vunpack.c.l.b16 %v756
    %v832 = vunpack.c.h.b16 %v756
    %v833 = vunpack.c.l.b16 %v757
    %v834 = vunpack.c.h.b16 %v757
    %v835 = vunpack.c.l.b16 %v758
    %v836 = vunpack.c.h.b16 %v758
    %v837 = vunpack.c.l.b16 %v759
    %v838 = vunpack.c.h.b16 %v759
    %v839 = vunpack.c.l.b16 %v760
    %v840 = vunpack.c.h.b16 %v760
    %v841 = vunpack.c.l.b16 %v761
    %v842 = vunpack.c.h.b16 %v761
    %v843 = vunpack.c.l.b16 %v762
    %v844 = vunpack.c.h.b16 %v762
    %v845 = vunpack.c.l.b16 %v763
    %v846 = vunpack.c.h.b16 %v763
    %v847 = vunpack.c.l.b16 %v764
    %v848 = vunpack.c.h.b16 %v764
    %v849 = vunpack.c.l.b16 %v765
    %v850 = vunpack.c.h.b16 %v765
    %v851 = vunpack.c.l.b16 %v766
    %v852 = vunpack.c.h.b16 %v766
    %v853 = vunpack.c.l.b16 %v767
    %v854 = vunpack.c.h.b16 %v767
    %v855 = vunpack.c.l.b16 %v768
    %v856 = vunpack.c.h.b16 %v768
    %v857 = vunpack.c.l.b16 %v769
    %v858 = vunpack.c.h.b16 %v769
    %v859 = vunpack.c.l.b16 %v770
    %v860 = vunpack.c.h.b16 %v770
    %v861 = vunpack.c.l.b16 %v771
    %v862 = vunpack.c.h.b16 %v771
    %v863 = vunpack.c.l.b16 %v772
    %v864 = vunpack.c.h.b16 %v772
    %v865 = vunpack.c.l.b16 %v773
    %v866 = vunpack.c.h.b16 %v773
    %v867 = vunpack.c.l.b16 %v774
    %v868 = vunpack.c.h.b16 %v774
    %v869 = vunpack.c.l.b16 %v775
    %v870 = vunpack.c.h.b16 %v775
    %v871 = vunpack.c.l.b16 %v776
    %v872 = vunpack.c.h.b16 %v776
    %v873 = vunpack.c.l.b16 %v777
    %v874 = vunpack.c.h.b16 %v777
    %v875 = vunpack.c.l.b16 %v778
    %v876 = vunpack.c.h.b16 %v778
    %v877 = vunpack.c.l.b16 %v779
    %v878 = vunpack.c.h.b16 %v779
    %v879 = vunpack.c.l.b16 %v780
    %v880 = vunpack.c.h.b16 %v780
    %v881 = vunpack.c.l.b16 %v781
    %v882 = vunpack.c.h.b16 %v781
    %v883 = vunpack.c.l.b16 %v782
    %v884 = vunpack.c.h.b16 %v782
    %v885 = vunpack.c.l.b16 %v783
    %v886 = vunpack.c.h.b16 %v783
    %v887 = vunpack.c.l.b16 %v784
    %v888 = vunpack.c.h.b16 %v784
    %v889 = vunpack.c.l.b16 %v785
    %v890 = vunpack.c.h.b16 %v785
    %v891 = vunpack.c.l.b16 %v786
    %v892 = vunpack.c.h.b16 %v786
    %v893 = vpack.c.b16 %v833, %v829
    %v894 = vpack.c.b16 %v834, %v830
    %v895 = vpack.c.b16 %v835, %v831
    %v896 = vpack.c.b16 %v836, %v832
    %v897 = vpack.c.b16 %v841, %v837
    %v898 = vpack.c.b16 %v842, %v838
    %v899 = vpack.c.b16 %v843, %v839
    %v900 = vpack.c.b16 %v844, %v840
    %v901 = vpack.c.b16 %v849, %v845
    %v902 = vpack.c.b16 %v850, %v846
    %v903 = vpack.c.b16 %v851, %v847
    %v904 = vpack.c.b16 %v852, %v848
    %v905 = vpack.c.b16 %v857, %v853
    %v906 = vpack.c.b16 %v858, %v854
    %v907 = vpack.c.b16 %v859, %v855
    %v908 = vpack.c.b16 %v860, %v856
    %v909 = vpack.c.b16 %v865, %v861
    %v910 = vpack.c.b16 %v866, %v862
    %v911 = vpack.c.b16 %v867, %v863
    %v912 = vpack.c.b16 %v868, %v864
    %v913 = vpack.c.b16 %v873, %v869
    %v914 = vpack.c.b16 %v874, %v870
    %v915 = vpack.c.b16 %v875, %v871
    %v916 = vpack.c.b16 %v876, %v872
    %v917 = vpack.c.b16 %v881, %v877
    %v918 = vpack.c.b16 %v882, %v878
    %v919 = vpack.c.b16 %v883, %v879
    %v920 = vpack.c.b16 %v884, %v880
    %v921 = vpack.c.b16 %v889, %v885
    %v922 = vpack.c.b16 %v890, %v886
    %v923 = vpack.c.b16 %v891, %v887
    %v924 = vpack.c.b16 %v892, %v888
    %957 = vmatpush.bf16.msra.mxu0 %v921
    %958 = vmatpush.bf16.msra.mxu0 %v917
    %959 = vmatpush.bf16.msra.mxu0 %v913
    %960 = vmatpush.bf16.msra.mxu0 %v909
    %961 = vmatpush.bf16.msra.mxu0 %v905
    %962 = vmatpush.bf16.msra.mxu0 %v901
    %963 = vmatpush.bf16.msra.mxu0 %v897
    %964 = vmatpush.bf16.msra.mxu0 %v893
    %965 = vmatmul.bf16.gmra.mxu0 %v754
    %v966 = vpop.f32.mrf.mxu0
    %v967 = vadd.f32 %v789, %v966
    %v968 = vpop.f32.mrf.mxu0
    %969 = vdwg.mxu0
    %970 = vmatpush.bf16.msra.mxu0 %v922
    %971 = vmatpush.bf16.msra.mxu0 %v918
    %972 = vmatpush.bf16.msra.mxu0 %v914
    %973 = vmatpush.bf16.msra.mxu0 %v910
    %974 = vmatpush.bf16.msra.mxu0 %v906
    %975 = vmatpush.bf16.msra.mxu0 %v902
    %976 = vmatpush.bf16.msra.mxu0 %v898
    %977 = vmatpush.bf16.msra.mxu0 %v894
    %978 = vmatmul.bf16.gmra.mxu0 %v754
    %v979 = vpop.f32.mrf.mxu0
    %v980 = vadd.f32 %v790, %v979
    %v981 = vpop.f32.mrf.mxu0
    %982 = vdwg.mxu0
    %983 = vmatpush.bf16.msra.mxu0 %v923
    %984 = vmatpush.bf16.msra.mxu0 %v919
    %985 = vmatpush.bf16.msra.mxu0 %v915
    %986 = vmatpush.bf16.msra.mxu0 %v911
    %987 = vmatpush.bf16.msra.mxu0 %v907
    %988 = vmatpush.bf16.msra.mxu0 %v903
    %989 = vmatpush.bf16.msra.mxu0 %v899
    %990 = vmatpush.bf16.msra.mxu0 %v895
    %991 = vmatmul.bf16.gmra.mxu0 %v754
    %v992 = vpop.f32.mrf.mxu0
    %v993 = vadd.f32 %v791, %v992
    %v994 = vpop.f32.mrf.mxu0
    %995 = vdwg.mxu0
    %996 = vmatpush.bf16.msra.mxu0 %v924
    %997 = vmatpush.bf16.msra.mxu0 %v920
    %998 = vmatpush.bf16.msra.mxu0 %v916
    %999 = vmatpush.bf16.msra.mxu0 %v912
    %1000 = vmatpush.bf16.msra.mxu0 %v908
    %1001 = vmatpush.bf16.msra.mxu0 %v904
    %1002 = vmatpush.bf16.msra.mxu0 %v900
    %1003 = vmatpush.bf16.msra.mxu0 %v896
    %1004 = vmatmul.bf16.gmra.mxu0 %v754
    %v1005 = vpop.f32.mrf.mxu0
    %v1006 = vadd.f32 %v792, %v1005
    %v1007 = vpop.f32.mrf.mxu0
    %1008 = vdwg.mxu0
    %v1009 = vmax.f32 %v967, 0.0
    %v1010 = vmax.f32 %v980, 0.0
    %v1011 = vmax.f32 %v993, 0.0
    %v1012 = vmax.f32 %v1006, 0.0
    %v1013 = vpack.c.bf16 %v1009, %v1009
    %v1014 = vpack.c.bf16 %v1010, %v1010
    %v1015 = vpack.c.bf16 %v1011, %v1011
    %v1016 = vpack.c.bf16 %v1012, %v1012
    %v1017 = vld [vmem:[#allocation11] sm:$0xf]
    %v1018 = vld [vmem:[#allocation11 + $0x4] sm:$0xf]
    %v1019 = vld [vmem:[#allocation11 + $0x8] sm:$0xf]
    %v1020 = vld [vmem:[#allocation11 + $0xc] sm:$0xf]
    %v1021 = vld [vmem:[#allocation11 + $0x10] sm:$0xf]
    %v1022 = vld [vmem:[#allocation11 + $0x14] sm:$0xf]
    %v1023 = vld [vmem:[#allocation11 + $0x18] sm:$0xf]
    %v1024 = vld [vmem:[#allocation11 + $0x1c] sm:$0xf]
    %v1025 = vld [vmem:[#allocation11 + $0x20] sm:$0xf]
    %v1026 = vld [vmem:[#allocation11 + $0x24] sm:$0xf]
    %v1027 = vld [vmem:[#allocation11 + $0x28] sm:$0xf]
    %v1028 = vld [vmem:[#allocation11 + $0x2c] sm:$0xf]
    %v1029 = vld [vmem:[#allocation11 + $0x30] sm:$0xf]
    %v1030 = vld [vmem:[#allocation11 + $0x34] sm:$0xf]
    %v1031 = vld [vmem:[#allocation11 + $0x38] sm:$0xf]
    %v1032 = vld [vmem:[#allocation11 + $0x3c] sm:$0xf]
    %v1033 = vld [vmem:[#allocation11 + $0x40] sm:$0xf]
    %v1034 = vld [vmem:[#allocation11 + $0x44] sm:$0xf]
    %v1035 = vld [vmem:[#allocation11 + $0x48] sm:$0xf]
    %v1036 = vld [vmem:[#allocation11 + $0x4c] sm:$0xf]
    %v1037 = vld [vmem:[#allocation11 + $0x50] sm:$0xf]
    %v1038 = vld [vmem:[#allocation11 + $0x54] sm:$0xf]
    %v1039 = vld [vmem:[#allocation11 + $0x58] sm:$0xf]
    %v1040 = vld [vmem:[#allocation11 + $0x5c] sm:$0xf]
    %v1041 = vld [vmem:[#allocation11 + $0x60] sm:$0xf]
    %v1042 = vld [vmem:[#allocation11 + $0x64] sm:$0xf]
    %v1043 = vld [vmem:[#allocation11 + $0x68] sm:$0xf]
    %v1044 = vld [vmem:[#allocation11 + $0x6c] sm:$0xf]
    %v1045 = vld [vmem:[#allocation11 + $0x70] sm:$0xf]
    %v1046 = vld [vmem:[#allocation11 + $0x74] sm:$0xf]
    %v1047 = vld [vmem:[#allocation11 + $0x78] sm:$0xf]
    %v1048 = vld [vmem:[#allocation11 + $0x7c] sm:$0xf]
    %v1049 = vld [vmem:[#allocation11 + $0x80] sm:$0xf]
    %v1050 = vld [vmem:[#allocation11 + $0x84] sm:$0xf]
    %v1051 = vld [vmem:[#allocation11 + $0x88] sm:$0xf]
    %v1052 = vld [vmem:[#allocation11 + $0x8c] sm:$0xf]
    %v1053 = vld [vmem:[#allocation11 + $0x90] sm:$0xf]
    %v1054 = vld [vmem:[#allocation11 + $0x94] sm:$0xf]
    %v1055 = vld [vmem:[#allocation11 + $0x98] sm:$0xf]
    %v1056 = vld [vmem:[#allocation11 + $0x9c] sm:$0xf]
    %v1057 = vld [vmem:[#allocation11 + $0xa0] sm:$0xf]
    %v1058 = vld [vmem:[#allocation11 + $0xa4] sm:$0xf]
    %v1059 = vld [vmem:[#allocation11 + $0xa8] sm:$0xf]
    %v1060 = vld [vmem:[#allocation11 + $0xac] sm:$0xf]
    %v1061 = vld [vmem:[#allocation11 + $0xb0] sm:$0xf]
    %v1062 = vld [vmem:[#allocation11 + $0xb4] sm:$0xf]
    %v1063 = vld [vmem:[#allocation11 + $0xb8] sm:$0xf]
    %v1064 = vld [vmem:[#allocation11 + $0xbc] sm:$0xf]
    %v1065 = vld [vmem:[#allocation11 + $0xc0] sm:$0xf]
    %v1066 = vld [vmem:[#allocation11 + $0xc4] sm:$0xf]
    %v1067 = vld [vmem:[#allocation11 + $0xc8] sm:$0xf]
    %v1068 = vld [vmem:[#allocation11 + $0xcc] sm:$0xf]
    %v1069 = vld [vmem:[#allocation11 + $0xd0] sm:$0xf]
    %v1070 = vld [vmem:[#allocation11 + $0xd4] sm:$0xf]
    %v1071 = vld [vmem:[#allocation11 + $0xd8] sm:$0xf]
    %v1072 = vld [vmem:[#allocation11 + $0xdc] sm:$0xf]
    %v1073 = vld [vmem:[#allocation11 + $0xe0] sm:$0xf]
    %v1074 = vld [vmem:[#allocation11 + $0xe4] sm:$0xf]
    %v1075 = vld [vmem:[#allocation11 + $0xe8] sm:$0xf]
    %v1076 = vld [vmem:[#allocation11 + $0xec] sm:$0xf]
    %v1077 = vld [vmem:[#allocation11 + $0xf0] sm:$0xf]
    %v1078 = vld [vmem:[#allocation11 + $0xf4] sm:$0xf]
    %v1079 = vld [vmem:[#allocation11 + $0xf8] sm:$0xf]
    %v1080 = vld [vmem:[#allocation11 + $0xfc] sm:$0xf]
    %v1081 = vld [vmem:[%s9] sm:$0x1]
    %v1083 = vperm.slane %v1081, 0
    %v1149 = vunpack.c.l.b16 %v1017
    %v1150 = vunpack.c.l.b16 %v1018
    %v1151 = vunpack.c.l.b16 %v1019
    %v1152 = vunpack.c.l.b16 %v1020
    %v1153 = vunpack.c.l.b16 %v1021
    %v1154 = vunpack.c.l.b16 %v1022
    %v1155 = vunpack.c.l.b16 %v1023
    %v1156 = vunpack.c.l.b16 %v1024
    %v1157 = vunpack.c.l.b16 %v1025
    %v1158 = vunpack.c.l.b16 %v1026
    %v1159 = vunpack.c.l.b16 %v1027
    %v1160 = vunpack.c.l.b16 %v1028
    %v1161 = vunpack.c.l.b16 %v1029
    %v1162 = vunpack.c.l.b16 %v1030
    %v1163 = vunpack.c.l.b16 %v1031
    %v1164 = vunpack.c.l.b16 %v1032
    %v1165 = vunpack.c.l.b16 %v1033
    %v1166 = vunpack.c.l.b16 %v1034
    %v1167 = vunpack.c.l.b16 %v1035
    %v1168 = vunpack.c.l.b16 %v1036
    %v1169 = vunpack.c.l.b16 %v1037
    %v1170 = vunpack.c.l.b16 %v1038
    %v1171 = vunpack.c.l.b16 %v1039
    %v1172 = vunpack.c.l.b16 %v1040
    %v1173 = vunpack.c.l.b16 %v1041
    %v1174 = vunpack.c.l.b16 %v1042
    %v1175 = vunpack.c.l.b16 %v1043
    %v1176 = vunpack.c.l.b16 %v1044
    %v1177 = vunpack.c.l.b16 %v1045
    %v1178 = vunpack.c.l.b16 %v1046
    %v1179 = vunpack.c.l.b16 %v1047
    %v1180 = vunpack.c.l.b16 %v1048
    %v1181 = vunpack.c.l.b16 %v1049
    %v1182 = vunpack.c.l.b16 %v1050
    %v1183 = vunpack.c.l.b16 %v1051
    %v1184 = vunpack.c.l.b16 %v1052
    %v1185 = vunpack.c.l.b16 %v1053
    %v1186 = vunpack.c.l.b16 %v1054
    %v1187 = vunpack.c.l.b16 %v1055
    %v1188 = vunpack.c.l.b16 %v1056
    %v1189 = vunpack.c.l.b16 %v1057
    %v1190 = vunpack.c.l.b16 %v1058
    %v1191 = vunpack.c.l.b16 %v1059
    %v1192 = vunpack.c.l.b16 %v1060
    %v1193 = vunpack.c.l.b16 %v1061
    %v1194 = vunpack.c.l.b16 %v1062
    %v1195 = vunpack.c.l.b16 %v1063
    %v1196 = vunpack.c.l.b16 %v1064
    %v1197 = vunpack.c.l.b16 %v1065
    %v1198 = vunpack.c.l.b16 %v1066
    %v1199 = vunpack.c.l.b16 %v1067
    %v1200 = vunpack.c.l.b16 %v1068
    %v1201 = vunpack.c.l.b16 %v1069
    %v1202 = vunpack.c.l.b16 %v1070
    %v1203 = vunpack.c.l.b16 %v1071
    %v1204 = vunpack.c.l.b16 %v1072
    %v1205 = vunpack.c.l.b16 %v1073
    %v1206 = vunpack.c.l.b16 %v1074
    %v1207 = vunpack.c.l.b16 %v1075
    %v1208 = vunpack.c.l.b16 %v1076
    %v1209 = vunpack.c.l.b16 %v1077
    %v1210 = vunpack.c.l.b16 %v1078
    %v1211 = vunpack.c.l.b16 %v1079
    %v1212 = vunpack.c.l.b16 %v1080
    %v1213 = vpack.c.b16 %v1150, %v1149
    %v1214 = vpack.c.b16 %v1152, %v1151
    %v1215 = vpack.c.b16 %v1154, %v1153
    %v1216 = vpack.c.b16 %v1156, %v1155
    %v1217 = vpack.c.b16 %v1158, %v1157
    %v1218 = vpack.c.b16 %v1160, %v1159
    %v1219 = vpack.c.b16 %v1162, %v1161
    %v1220 = vpack.c.b16 %v1164, %v1163
    %v1221 = vpack.c.b16 %v1166, %v1165
    %v1222 = vpack.c.b16 %v1168, %v1167
    %v1223 = vpack.c.b16 %v1170, %v1169
    %v1224 = vpack.c.b16 %v1172, %v1171
    %v1225 = vpack.c.b16 %v1174, %v1173
    %v1226 = vpack.c.b16 %v1176, %v1175
    %v1227 = vpack.c.b16 %v1178, %v1177
    %v1228 = vpack.c.b16 %v1180, %v1179
    %v1229 = vpack.c.b16 %v1182, %v1181
    %v1230 = vpack.c.b16 %v1184, %v1183
    %v1231 = vpack.c.b16 %v1186, %v1185
    %v1232 = vpack.c.b16 %v1188, %v1187
    %v1233 = vpack.c.b16 %v1190, %v1189
    %v1234 = vpack.c.b16 %v1192, %v1191
    %v1235 = vpack.c.b16 %v1194, %v1193
    %v1236 = vpack.c.b16 %v1196, %v1195
    %v1237 = vpack.c.b16 %v1198, %v1197
    %v1238 = vpack.c.b16 %v1200, %v1199
    %v1239 = vpack.c.b16 %v1202, %v1201
    %v1240 = vpack.c.b16 %v1204, %v1203
    %v1241 = vpack.c.b16 %v1206, %v1205
    %v1242 = vpack.c.b16 %v1208, %v1207
    %v1243 = vpack.c.b16 %v1210, %v1209
    %v1244 = vpack.c.b16 %v1212, %v1211
    %1277 = vmatpush.bf16.msra.mxu0 %v1220
    %1278 = vmatpush.bf16.msra.mxu0 %v1219
    %1279 = vmatpush.bf16.msra.mxu0 %v1218
    %1280 = vmatpush.bf16.msra.mxu0 %v1217
    %1281 = vmatpush.bf16.msra.mxu0 %v1216
    %1282 = vmatpush.bf16.msra.mxu0 %v1215
    %1283 = vmatpush.bf16.msra.mxu0 %v1214
    %1284 = vmatpush.bf16.msra.mxu0 %v1213
    %1285 = vmatmul.bf16.gmra.mxu0 %v1013
    %v1286 = vpop.f32.mrf.mxu0
    %v1287 = vadd.f32 %v1083, %v1286
    %v1288 = vpop.f32.mrf.mxu0
    %1289 = vdwg.mxu0
    %1290 = vmatpush.bf16.msra.mxu0 %v1228
    %1291 = vmatpush.bf16.msra.mxu0 %v1227
    %1292 = vmatpush.bf16.msra.mxu0 %v1226
    %1293 = vmatpush.bf16.msra.mxu0 %v1225
    %1294 = vmatpush.bf16.msra.mxu0 %v1224
    %1295 = vmatpush.bf16.msra.mxu0 %v1223
    %1296 = vmatpush.bf16.msra.mxu0 %v1222
    %1297 = vmatpush.bf16.msra.mxu0 %v1221
    %1298 = vmatmul.bf16.gmra.mxu0 %v1014
    %v1299 = vpop.f32.mrf.mxu0
    %v1300 = vadd.f32 %v1287, %v1299
    %v1301 = vpop.f32.mrf.mxu0
    %1302 = vdwg.mxu0
    %1303 = vmatpush.bf16.msra.mxu0 %v1236
    %1304 = vmatpush.bf16.msra.mxu0 %v1235
    %1305 = vmatpush.bf16.msra.mxu0 %v1234
    %1306 = vmatpush.bf16.msra.mxu0 %v1233
    %1307 = vmatpush.bf16.msra.mxu0 %v1232
    %1308 = vmatpush.bf16.msra.mxu0 %v1231
    %1309 = vmatpush.bf16.msra.mxu0 %v1230
    %1310 = vmatpush.bf16.msra.mxu0 %v1229
    %1311 = vmatmul.bf16.gmra.mxu0 %v1015
    %v1312 = vpop.f32.mrf.mxu0
    %v1313 = vadd.f32 %v1300, %v1312
    %v1314 = vpop.f32.mrf.mxu0
    %1315 = vdwg.mxu0
    %1316 = vmatpush.bf16.msra.mxu0 %v1244
    %1317 = vmatpush.bf16.msra.mxu0 %v1243
    %1318 = vmatpush.bf16.msra.mxu0 %v1242
    %1319 = vmatpush.bf16.msra.mxu0 %v1241
    %1320 = vmatpush.bf16.msra.mxu0 %v1240
    %1321 = vmatpush.bf16.msra.mxu0 %v1239
    %1322 = vmatpush.bf16.msra.mxu0 %v1238
    %1323 = vmatpush.bf16.msra.mxu0 %v1237
    %1324 = vmatmul.bf16.gmra.mxu0 %v1016
    %v1325 = vpop.f32.mrf.mxu0
    %v1326 = vadd.f32 %v1313, %v1325
    %v1327 = vpop.f32.mrf.mxu0
    %1328 = vdwg.mxu0
    %v1329 = vxor.u32 %v1326, 2147483648
    %v1330 = vmul.f32 %v1329, 1.442695
    %v1331 = vpow.pop %v1330
    %v1332 = vadd.f32 %v1331, 1.0
    %v1333 = vrcp.pop %v1332
    %v1334 = vmul.f32 %v1332, %v1333
    %v1335 = vsub.f32 1.0, %v1334
    %v1336 = vmul.f32 %v1333, %v1335
    %v1337 = vadd.f32 %v1333, %v1336
    %vm1338 = vweird.f32 %v1332
    %vm1339 = vweird.f32 %v1333
    %vm1340 = vmor %vm1338, %vm1339
    %v1341 = vsel %vm1340, %v1333, %v1337
    %v1342 = vand.u32 2147483647, %v1332
    %vm1343 = vcmp.eq.f32.partialorder %v1342, 8.507059e+37
    %v1344 = vand.u32 %v1332, 2147483648
    %v1345 = vor.u32 1.1754944e-38, %v1344
    %v1346 = vsel %vm1343, %v1345, %v1341
    %v1347 = vmul.f32 1.0, %v1346
    %v1348 = vpack.c.bf16 %v1347, %v1347
    %1349 = vst [vmem:[#allocation13] sm:$0xf] %v1348
    %1350 = vst [vmem:[%s11] sm:$0xff] %v692
    %1351 = vst [vmem:[%s11 + $0x8] sm:$0xff] %v744
    // Predicated region
    $region66: #{vae_forward.1} parent=1 // pred_check
      _
    $region67: #{vae_forward.1} parent=1 // pred_check_branch
      %1353 = sbr.rel (0) target = $region69
    $region68: #{vae_forward.1} parent=1 // pred_region
      %1355 = vsyncadd [#allocation4], 0
      %s1357 = sshll.u32 [#allocation13], 4
      %s1358 = int_to_ptr.vmem [resolvable:$true] %s1357
      %s1359 = sshll.u32 %s10, 4
      %s1360 = int_to_ptr.hbm [resolvable:$true] %s1359
      %1362 = dma.vmem_to_hbm [thread:$0]  %s1358, 64, %s1360, [#allocation4]
    $region69: #{vae_forward.1} parent=1 // pred_fallthru
      _
    // Predicated region
    $region70: #{vae_forward.1} parent=1 // pred_check
      _
    $region71: #{vae_forward.1} parent=1 // pred_check_branch
      %1364 = sbr.rel (0) target = $region73
    $region72: #{vae_forward.1} parent=1 // pred_region
      _
    $region73: #{vae_forward.1} parent=1 // pred_fallthru
      _
    // Predicated region
    $region74: #{vae_forward.1} parent=1 // pred_check
      _
    $region75: #{vae_forward.1} parent=1 // pred_check_branch
      %1366 = sbr.rel (0) target = $region77
    $region76: #{vae_forward.1} parent=1 // pred_region
      %1368 = dma.done [#allocation4], 64
    $region77: #{vae_forward.1} parent=1 // pred_fallthru
      _
    // Predicated region
    $region78: #{vae_forward.1} parent=1 // pred_check
      _
    $region79: #{vae_forward.1} parent=1 // pred_check_branch
      %1370 = sbr.rel (0) target = $region81
    $region80: #{vae_forward.1} parent=1 // pred_region
      _
    $region81: #{vae_forward.1} parent=1 // pred_fallthru
      _
    %1371 = vsyncpa [#allocation3], 1
    %1372 = vsyncpa [#allocation6], 1
    %1373 = vsyncpa [#allocation9], 1
    %1374 = vsyncpa [#allocation12], 1
    %1375 = vsyncpa [#allocation4], 1

</llo_original>
